<compile_context>
chip_gen: v6e
topology: v6e:2x2x1
jax: 0.10.0
libtpu: 0.0.40
codegen_flags: <defaults>
</compile_context>

<pallas_src>
import functools

import jax
import jax.numpy as jnp
from jax import lax
from jax.experimental import pallas as pl
from jax.experimental.pallas import tpu as pltpu


# Leave >=16 MiB headroom under v7x's 64 MiB physical VMEM; also well above the
# 16/32 MiB scoped defaults on v5e/v6e so larger blocks don't trip the default.
_VMEM_LIMIT_BYTES = 48 * 1024 * 1024


def _round_up(x, m):
    return (x + m - 1) // m * m


def _pick_batch_block(batch, batch_block, max_block=8):
    """Small fixed batch block: per-step VMEM stays bounded as batch grows
    (restoring double-buffered pipelining with many cheap ~0.35us steps), and
    B//bb >= 2 whenever batch >= 2 so both v7x TensorCores get a parallel step."""
    if batch_block is not None:
        assert batch % batch_block == 0
        return batch_block
    cand = min(max_block, max(1, batch // 2))
    while batch % cand:
        cand -= 1
    return cand


# ---------------------------------------------------------------------------
# Routing branch (num_route_weights != -1)
# ---------------------------------------------------------------------------
def _routing_kernel(x_ref, w_ref, o_ref, *, num_iterations):
    # x_ref: (NB, Din, R)   w_ref: (C, Din, Dout, R)   o_ref: (NB, C, Dout)
    # R sits on lanes throughout the routing loop -> full vreg width on the VPU,
    # lane (XLU) reduces for the route-sum, sublane reduces for the softmax.
    x = x_ref[...]                                   # f32
    w = w_ref[...]                                   # f32
    NB, Din, R = x.shape
    C, _, Dout, _ = w.shape

    # priors u[n,c,e,r] = sum_d x[n,d,r] * w[c,d,e,r]
    # Din is tiny (e.g. 8): a static FMA loop over d keeps everything lane-dense
    # and never materializes the old (NB,C,R,Din,Dout) broadcast temporary.
    u = jnp.zeros((NB, C, Dout, R), jnp.float32)
    for d in range(Din):
        u = u + x[:, d][:, None, None, :] * w[:, d][None]

    # All Dout columns of the PyTorch logits tensor are identical (the logit
    # update is reduced over Dout then broadcast back), so logits live at
    # (NB, C, R): 16x less softmax work, numerically the same routing.
    logits = jnp.zeros((NB, C, R), jnp.float32)
    outputs = jnp.zeros((NB, C, Dout), jnp.float32)
    for _ in range(num_iterations):                  # unrolled at trace time
        # softmax over the capsule axis (PyTorch softmax(logits, dim=1));
        # C is on sublanes -> XLU reduce.  Exact divide: approx-reciprocal
        # error would compound across routing iterations.
        m = jnp.max(logits, axis=1, keepdims=True)
        e = jnp.exp(logits - m)
        probs = e / jnp.sum(e, axis=1, keepdims=True)           # (NB, C, R)

        # route-sum over R: s[n,c,e] = sum_r probs[n,c,r] * u[n,c,e,r]
        s = jnp.sum(probs[:, :, None, :] * u, axis=3)           # (NB, C, Dout)

        # squash(dim=2) on a size-1 axis reduces to elementwise:
        #   s^2/(1+s^2) * s/|s|  ==  s*|s| / (1+s^2)
        # (also avoids the 0*inf -> NaN of the rsqrt form when s == 0).
        sq = s * s
        outputs = s * jnp.abs(s) * pl.reciprocal(1.0 + sq, approx=True)

        # logit update: probs are constant over Dout in the PyTorch module, so
        # (outputs * probs).sum(-1) == probs * sum_e outputs.
        osum = jnp.sum(outputs, axis=2)[:, :, None]             # (NB, C, 1)
        logits = logits + probs * osum

    # Output store is tiny (C*Dout f32 per row); kept as (NB, C, Dout) to avoid
    # an in-kernel sublane->lane reshape.  Wrapper reshapes to (B,C,1,1,Dout).
    o_ref[...] = outputs


def capsule_routing_forward(x, routing_weights, num_iterations=3, batch_block=None):
    B, R, Din = x.shape
    C, R2, Din2, Dout = routing_weights.shape
    assert (R, Din) == (R2, Din2)
    bb = _pick_batch_block(B, batch_block)

    # Wrapper-side transposes put R on lanes for the kernel (free XLA layout
    # plumbing).  Routing math stays f32 (v5e has no bf16 VPU/EUP).  The weight
    # block is resident across grid steps; at real CapsNet sizes (C=10, R=1152,
    # Din=8, Dout=16) it is ~5.9 MiB f32, well inside the 48 MiB limit below.
    # TODO(synk): optionally ship routing_weights as bf16 (upcast in-kernel) to
    # halve the resident weight footprint on v7x's 64 MiB VMEM.
    x_t = jnp.transpose(x.astype(jnp.float32), (0, 2, 1))                   # (B, Din, R)
    w_t = jnp.transpose(routing_weights.astype(jnp.float32), (0, 2, 3, 1))  # (C, Din, Dout, R)

    out = pl.pallas_call(
        functools.partial(_routing_kernel, num_iterations=num_iterations),
        out_shape=jax.ShapeDtypeStruct((B, C, Dout), jnp.float32),
        grid=(B // bb,),
        in_specs=[
            pl.BlockSpec((bb, Din, R), lambda g: (g, 0, 0)),
            pl.BlockSpec((C, Din, Dout, R), lambda g: (0, 0, 0, 0)),  # resident
        ],
        out_specs=pl.BlockSpec((bb, C, Dout), lambda g: (g, 0, 0)),
        compiler_params=pltpu.CompilerParams(
            dimension_semantics=("parallel",),
            vmem_limit_bytes=_VMEM_LIMIT_BYTES),
    )(x_t, w_t)
    # PyTorch returns shape (B, C, 1, 1, Dout)
    return out.reshape(B, C, 1, 1, Dout)


# ---------------------------------------------------------------------------
# Conv branch (num_route_weights == -1)
# ---------------------------------------------------------------------------
def _conv_caps_kernel(p_ref, w_ref, o_ref):
    # p_ref: (Mb, K_pad) bf16   w_ref: (K_pad, NC_pad) bf16   o_ref: (Mb, NC_pad) f32
    # Batch is folded into the matmul M dimension -> one MXU matmul per grid
    # step (fills the systolic array) instead of a per-item loop of 16-row matmuls.
    o_ref[...] = jnp.dot(p_ref[...], w_ref[...], preferred_element_type=jnp.float32)


def _im2col(x, k, stride):
    # x: NCHW.  Patch ordering matches PyTorch Conv2d weight flatten (Cin, kh, kw).
    B, Cin, H, W = x.shape
    Hout = (H - k) // stride + 1
    Wout = (W - k) // stride + 1
    cols = []
    for kh in range(k):
        for kw in range(k):
            cols.append(
                x[:, :, kh: kh + stride * Hout: stride, kw: kw + stride * Wout: stride]
            )
    patches = jnp.stack(cols, axis=2)                      # (B, Cin, k*k, Hout, Wout)
    patches = patches.reshape(B, Cin * k * k, Hout * Wout)
    patches = jnp.transpose(patches, (0, 2, 1))            # (B, P, Cin*k*k)
    return patches, Hout * Wout


def capsule_conv_forward(x, conv_weights, conv_bias, kernel_size=9, stride=2,
                         batch_block=None):
    # layout: x is NCHW (B, Cin, H, W); conv_weights is (num_caps, Cout, Cin, k, k)
    B, Cin, H, W = x.shape
    num_caps, Cout, Cin2, k, _ = conv_weights.shape
    assert Cin2 == Cin and k == kernel_size
    bb = _pick_batch_block(B, batch_block)

    # im2col stays as XLA glue; compute bf16 on the MXU, accumulate f32.
    # TODO(synk): fuse im2col into the kernel (phase-decomposed unit-stride
    # slices of the NCHW block) to drop the ~k^2/stride^2 HBM inflation.
    patches, P = _im2col(x.astype(jnp.bfloat16), kernel_size, stride)   # (B, P, K)
    K = patches.shape[-1]
    NCout = num_caps * Cout

    # MXU-friendly padding: K to a multiple of 128 (clean K-tiles, aligned
    # DMAs), NCout to a multiple of 128 (lane-dense, unmasked stores).
    K_pad = _round_up(K, 128)
    NC_pad = _round_up(NCout, 128)

    patches2d = patches.reshape(B * P, K)
    if K_pad != K:
        patches2d = jnp.pad(patches2d, ((0, 0), (0, K_pad - K)))

    # All capsule convolutions fused into ONE weight matrix; column = c*Cout + e.
    w_all = jnp.transpose(conv_weights.reshape(num_caps, Cout, K), (2, 0, 1))
    w_all = w_all.reshape(K, NCout).astype(jnp.bfloat16)
    if K_pad != K or NC_pad != NCout:
        w_all = jnp.pad(w_all, ((0, K_pad - K), (0, NC_pad - NCout)))

    Mb = bb * P
    if Mb % 8 != 0:            # sublane alignment; fall back to one full-M block
        bb, Mb = B, B * P

    out = pl.pallas_call(
        _conv_caps_kernel,
        out_shape=jax.ShapeDtypeStruct((B * P, NC_pad), jnp.float32),
        grid=(B // bb,),
        in_specs=[
            pl.BlockSpec((Mb, K_pad), lambda g: (g, 0)),
            pl.BlockSpec((K_pad, NC_pad), lambda g: (0, 0)),   # resident weights
        ],
        out_specs=pl.BlockSpec((Mb, NC_pad), lambda g: (g, 0)),
        compiler_params=pltpu.CompilerParams(
            dimension_semantics=("parallel",),
            vmem_limit_bytes=_VMEM_LIMIT_BYTES),
    )(patches2d, w_all)

    # Bias add + the PyTorch view/cat/transpose/view epilogue in the wrapper
    # (XLA fuses these for free; no degenerate bias DMAs in-kernel).
    out = out[:, :NCout] + conv_bias.reshape(NCout).astype(jnp.float32)[None, :]
    out = out.reshape(B, P, num_caps, Cout)
    out = jnp.transpose(out, (0, 2, 1, 3))                     # (B, num_caps, P, Cout)
    return out.reshape(B, num_caps * P, Cout)


# ---------------------------------------------------------------------------
# Pure-JAX references (for correctness check only)
# ---------------------------------------------------------------------------
def _routing_ref(x, w, num_iterations):
    u = jnp.einsum("brd,crde->bcre", x, w, precision=lax.Precision.HIGHEST)
    u = u[:, :, :, None, :]                                   # (B, C, R, 1, Dout)
    logits = jnp.zeros_like(u)
    outputs = None
    for _ in range(num_iterations):
        m = jnp.max(logits, axis=1, keepdims=True)
        e = jnp.exp(logits - m)
        probs = e / jnp.sum(e, axis=1, keepdims=True)
        outputs = jnp.sum(probs * u, axis=2, keepdims=True)
        sq = jnp.sum(outputs ** 2, axis=2, keepdims=True)
        scale = sq / (1.0 + sq)
        outputs = scale * outputs / jnp.sqrt(sq)
        change = jnp.sum(outputs * probs, axis=-1, keepdims=True)
        logits = logits + change
    return outputs


def _conv_ref(x, conv_weights, conv_bias, stride):
    num_caps, Cout = conv_weights.shape[0], conv_weights.shape[1]
    B = x.shape[0]
    outs = []
    for c in range(num_caps):
        y = lax.conv_general_dilated(
            x, conv_weights[c], window_strides=(stride, stride), padding="VALID",
            dimension_numbers=("NCHW", "OIHW", "NCHW"),
            precision=lax.Precision.HIGHEST)
        y = y + conv_bias[c][None, :, None, None]
        outs.append(y.reshape(B, Cout, -1, 1))
    out = jnp.concatenate(outs, axis=-1)                     # (B, Cout, P, num_caps)
    out = jnp.swapaxes(out, 1, 3)                            # (B, num_caps, P, Cout)
    return out.reshape(B, -1, Cout)


if __name__ == "__main__":
    key = jax.random.PRNGKey(0)
    k1, k2, k3, k4, k5 = jax.random.split(key, 5)

    # --- routing branch: CapsuleLayer(num_route_weights=32, num_capsules=4,
    #                                  input_channels=8, output_channels=16) ---
    B, C, R, Din, Dout, n_iter = 2, 4, 32, 8, 16, 3
    x_route = jax.random.normal(k1, (B, R, Din), jnp.float32)
    routing_weights = jax.random.normal(k2, (C, R, Din, Dout), jnp.float32)

    out_route = jax.block_until_ready(
        capsule_routing_forward(x_route, routing_weights, n_iter))
    ref_route = _routing_ref(x_route, routing_weights, n_iter)
    assert out_route.shape == (B, C, 1, 1, Dout)
    assert jnp.allclose(out_route, ref_route, rtol=5e-3, atol=5e-3)

    # --- conv branch: CapsuleLayer(num_route_weights=-1, num_capsules=4,
    #                               input_channels=4, output_channels=8) ---
    num_caps, Cin, Cout, H, W, ksize, stride = 4, 4, 8, 16, 16, 9, 2
    x_conv = jax.random.normal(k3, (B, Cin, H, W), jnp.float32)
    conv_w = 0.05 * jax.random.normal(k4, (num_caps, Cout, Cin, ksize, ksize), jnp.float32)
    conv_b = 0.05 * jax.random.normal(k5, (num_caps, Cout), jnp.float32)

    out_conv = jax.block_until_ready(
        capsule_conv_forward(x_conv, conv_w, conv_b, ksize, stride))
    ref_conv = _conv_ref(x_conv, conv_w, conv_b, stride)
    Hout = (H - ksize) // stride + 1
    assert out_conv.shape == (B, num_caps * Hout * Hout, Cout)
    assert jnp.allclose(out_conv, ref_conv, rtol=2e-2, atol=2e-2)

    print("KERNEL_OK")
</pallas_src>

<mosaic_0001>
module attributes {stable_mosaic.version = 11 : i64} {
  func.func @_routing_kernel(%arg0: i32, %arg1: memref<1x8x32xf32, #tpu.memory_space<vmem>>, %arg2: memref<4x8x16x32xf32, #tpu.memory_space<vmem>>, %arg3: memref<1x4x16xf32, #tpu.memory_space<vmem>>) attributes {dimension_semantics = [#tpu.dimension_semantics<parallel>], iteration_bounds = array<i64: 2>, scalar_prefetch = 0 : i64, scratch_operands = 0 : i64, tpu.core_type = #tpu.core_type<tc>, window_params = [{transform_indices = @transform_0, window_bounds = array<i64: 1, 8, 32>}, {pipeline_mode = #tpu.pipeline_mode<synchronous>, transform_indices = @transform_1, window_bounds = array<i64: 4, 8, 16, 32>}, {transform_indices = @transform_2, window_bounds = array<i64: 1, 4, 16>}]} {
    %c0 = arith.constant 0 : index
    %c0_0 = arith.constant 0 : index
    %c0_1 = arith.constant 0 : index
    %0 = vector.load %arg1[%c0, %c0_0, %c0_1] : memref<1x8x32xf32, #tpu.memory_space<vmem>>, vector<1x8x32xf32>
    %c0_2 = arith.constant 0 : index
    %c0_3 = arith.constant 0 : index
    %c0_4 = arith.constant 0 : index
    %c0_5 = arith.constant 0 : index
    %1 = vector.load %arg2[%c0_2, %c0_3, %c0_4, %c0_5] : memref<4x8x16x32xf32, #tpu.memory_space<vmem>>, vector<4x8x16x32xf32>
    %cst = arith.constant 0.000000e+00 : f32
    %2 = vector.broadcast %cst : f32 to vector<1x4x16x32xf32>
    %3 = vector.extract_strided_slice %0 {offsets = [0, 0, 0], sizes = [1, 1, 32], strides = [1, 1, 1]} : vector<1x8x32xf32> to vector<1x1x32xf32>
    %4 = vector.shape_cast %3 : vector<1x1x32xf32> to vector<1x32xf32>
    %5 = vector.shape_cast %4 : vector<1x32xf32> to vector<1x1x1x32xf32>
    %6 = vector.extract_strided_slice %1 {offsets = [0, 0, 0, 0], sizes = [4, 1, 16, 32], strides = [1, 1, 1, 1]} : vector<4x8x16x32xf32> to vector<4x1x16x32xf32>
    %7 = vector.shape_cast %6 : vector<4x1x16x32xf32> to vector<4x16x32xf32>
    %8 = vector.shape_cast %7 : vector<4x16x32xf32> to vector<1x4x16x32xf32>
    %9 = vector.broadcast %5 : vector<1x1x1x32xf32> to vector<1x4x16x32xf32>
    %10 = arith.mulf %9, %8 : vector<1x4x16x32xf32>
    %11 = arith.addf %2, %10 : vector<1x4x16x32xf32>
    %12 = vector.extract_strided_slice %0 {offsets = [0, 1, 0], sizes = [1, 1, 32], strides = [1, 1, 1]} : vector<1x8x32xf32> to vector<1x1x32xf32>
    %13 = vector.shape_cast %12 : vector<1x1x32xf32> to vector<1x32xf32>
    %14 = vector.shape_cast %13 : vector<1x32xf32> to vector<1x1x1x32xf32>
    %15 = vector.extract_strided_slice %1 {offsets = [0, 1, 0, 0], sizes = [4, 1, 16, 32], strides = [1, 1, 1, 1]} : vector<4x8x16x32xf32> to vector<4x1x16x32xf32>
    %16 = vector.shape_cast %15 : vector<4x1x16x32xf32> to vector<4x16x32xf32>
    %17 = vector.shape_cast %16 : vector<4x16x32xf32> to vector<1x4x16x32xf32>
    %18 = vector.broadcast %14 : vector<1x1x1x32xf32> to vector<1x4x16x32xf32>
    %19 = arith.mulf %18, %17 : vector<1x4x16x32xf32>
    %20 = arith.addf %11, %19 : vector<1x4x16x32xf32>
    %21 = vector.extract_strided_slice %0 {offsets = [0, 2, 0], sizes = [1, 1, 32], strides = [1, 1, 1]} : vector<1x8x32xf32> to vector<1x1x32xf32>
    %22 = vector.shape_cast %21 : vector<1x1x32xf32> to vector<1x32xf32>
    %23 = vector.shape_cast %22 : vector<1x32xf32> to vector<1x1x1x32xf32>
    %24 = vector.extract_strided_slice %1 {offsets = [0, 2, 0, 0], sizes = [4, 1, 16, 32], strides = [1, 1, 1, 1]} : vector<4x8x16x32xf32> to vector<4x1x16x32xf32>
    %25 = vector.shape_cast %24 : vector<4x1x16x32xf32> to vector<4x16x32xf32>
    %26 = vector.shape_cast %25 : vector<4x16x32xf32> to vector<1x4x16x32xf32>
    %27 = vector.broadcast %23 : vector<1x1x1x32xf32> to vector<1x4x16x32xf32>
    %28 = arith.mulf %27, %26 : vector<1x4x16x32xf32>
    %29 = arith.addf %20, %28 : vector<1x4x16x32xf32>
    %30 = vector.extract_strided_slice %0 {offsets = [0, 3, 0], sizes = [1, 1, 32], strides = [1, 1, 1]} : vector<1x8x32xf32> to vector<1x1x32xf32>
    %31 = vector.shape_cast %30 : vector<1x1x32xf32> to vector<1x32xf32>
    %32 = vector.shape_cast %31 : vector<1x32xf32> to vector<1x1x1x32xf32>
    %33 = vector.extract_strided_slice %1 {offsets = [0, 3, 0, 0], sizes = [4, 1, 16, 32], strides = [1, 1, 1, 1]} : vector<4x8x16x32xf32> to vector<4x1x16x32xf32>
    %34 = vector.shape_cast %33 : vector<4x1x16x32xf32> to vector<4x16x32xf32>
    %35 = vector.shape_cast %34 : vector<4x16x32xf32> to vector<1x4x16x32xf32>
    %36 = vector.broadcast %32 : vector<1x1x1x32xf32> to vector<1x4x16x32xf32>
    %37 = arith.mulf %36, %35 : vector<1x4x16x32xf32>
    %38 = arith.addf %29, %37 : vector<1x4x16x32xf32>
    %39 = vector.extract_strided_slice %0 {offsets = [0, 4, 0], sizes = [1, 1, 32], strides = [1, 1, 1]} : vector<1x8x32xf32> to vector<1x1x32xf32>
    %40 = vector.shape_cast %39 : vector<1x1x32xf32> to vector<1x32xf32>
    %41 = vector.shape_cast %40 : vector<1x32xf32> to vector<1x1x1x32xf32>
    %42 = vector.extract_strided_slice %1 {offsets = [0, 4, 0, 0], sizes = [4, 1, 16, 32], strides = [1, 1, 1, 1]} : vector<4x8x16x32xf32> to vector<4x1x16x32xf32>
    %43 = vector.shape_cast %42 : vector<4x1x16x32xf32> to vector<4x16x32xf32>
    %44 = vector.shape_cast %43 : vector<4x16x32xf32> to vector<1x4x16x32xf32>
    %45 = vector.broadcast %41 : vector<1x1x1x32xf32> to vector<1x4x16x32xf32>
    %46 = arith.mulf %45, %44 : vector<1x4x16x32xf32>
    %47 = arith.addf %38, %46 : vector<1x4x16x32xf32>
    %48 = vector.extract_strided_slice %0 {offsets = [0, 5, 0], sizes = [1, 1, 32], strides = [1, 1, 1]} : vector<1x8x32xf32> to vector<1x1x32xf32>
    %49 = vector.shape_cast %48 : vector<1x1x32xf32> to vector<1x32xf32>
    %50 = vector.shape_cast %49 : vector<1x32xf32> to vector<1x1x1x32xf32>
    %51 = vector.extract_strided_slice %1 {offsets = [0, 5, 0, 0], sizes = [4, 1, 16, 32], strides = [1, 1, 1, 1]} : vector<4x8x16x32xf32> to vector<4x1x16x32xf32>
    %52 = vector.shape_cast %51 : vector<4x1x16x32xf32> to vector<4x16x32xf32>
    %53 = vector.shape_cast %52 : vector<4x16x32xf32> to vector<1x4x16x32xf32>
    %54 = vector.broadcast %50 : vector<1x1x1x32xf32> to vector<1x4x16x32xf32>
    %55 = arith.mulf %54, %53 : vector<1x4x16x32xf32>
    %56 = arith.addf %47, %55 : vector<1x4x16x32xf32>
    %57 = vector.extract_strided_slice %0 {offsets = [0, 6, 0], sizes = [1, 1, 32], strides = [1, 1, 1]} : vector<1x8x32xf32> to vector<1x1x32xf32>
    %58 = vector.shape_cast %57 : vector<1x1x32xf32> to vector<1x32xf32>
    %59 = vector.shape_cast %58 : vector<1x32xf32> to vector<1x1x1x32xf32>
    %60 = vector.extract_strided_slice %1 {offsets = [0, 6, 0, 0], sizes = [4, 1, 16, 32], strides = [1, 1, 1, 1]} : vector<4x8x16x32xf32> to vector<4x1x16x32xf32>
    %61 = vector.shape_cast %60 : vector<4x1x16x32xf32> to vector<4x16x32xf32>
    %62 = vector.shape_cast %61 : vector<4x16x32xf32> to vector<1x4x16x32xf32>
    %63 = vector.broadcast %59 : vector<1x1x1x32xf32> to vector<1x4x16x32xf32>
    %64 = arith.mulf %63, %62 : vector<1x4x16x32xf32>
    %65 = arith.addf %56, %64 : vector<1x4x16x32xf32>
    %66 = vector.extract_strided_slice %0 {offsets = [0, 7, 0], sizes = [1, 1, 32], strides = [1, 1, 1]} : vector<1x8x32xf32> to vector<1x1x32xf32>
    %67 = vector.shape_cast %66 : vector<1x1x32xf32> to vector<1x32xf32>
    %68 = vector.shape_cast %67 : vector<1x32xf32> to vector<1x1x1x32xf32>
    %69 = vector.extract_strided_slice %1 {offsets = [0, 7, 0, 0], sizes = [4, 1, 16, 32], strides = [1, 1, 1, 1]} : vector<4x8x16x32xf32> to vector<4x1x16x32xf32>
    %70 = vector.shape_cast %69 : vector<4x1x16x32xf32> to vector<4x16x32xf32>
    %71 = vector.shape_cast %70 : vector<4x16x32xf32> to vector<1x4x16x32xf32>
    %72 = vector.broadcast %68 : vector<1x1x1x32xf32> to vector<1x4x16x32xf32>
    %73 = arith.mulf %72, %71 : vector<1x4x16x32xf32>
    %74 = arith.addf %65, %73 : vector<1x4x16x32xf32>
    %cst_6 = arith.constant 0.000000e+00 : f32
    %75 = vector.broadcast %cst_6 : f32 to vector<1x4x32xf32>
    %cst_7 = arith.constant dense<0xFF800000> : vector<1x32xf32>
    %76 = vector.multi_reduction <maximumf>, %75, %cst_7 [1] : vector<1x4x32xf32> to vector<1x32xf32>
    %77 = vector.shape_cast %76 : vector<1x32xf32> to vector<1x1x32xf32>
    %78 = vector.broadcast %77 : vector<1x1x32xf32> to vector<1x4x32xf32>
    %79 = arith.subf %75, %78 : vector<1x4x32xf32>
    %80 = math.exp %79 : vector<1x4x32xf32>
    %cst_8 = arith.constant dense<0.000000e+00> : vector<1x32xf32>
    %81 = vector.multi_reduction <add>, %80, %cst_8 [1] : vector<1x4x32xf32> to vector<1x32xf32>
    %82 = vector.shape_cast %81 : vector<1x32xf32> to vector<1x1x32xf32>
    %83 = vector.broadcast %82 : vector<1x1x32xf32> to vector<1x4x32xf32>
    %84 = arith.divf %80, %83 : vector<1x4x32xf32>
    %85 = vector.shape_cast %84 : vector<1x4x32xf32> to vector<1x4x1x32xf32>
    %86 = vector.broadcast %85 : vector<1x4x1x32xf32> to vector<1x4x16x32xf32>
    %87 = arith.mulf %86, %74 : vector<1x4x16x32xf32>
    %cst_9 = arith.constant dense<0.000000e+00> : vector<1x4x16xf32>
    %88 = vector.multi_reduction <add>, %87, %cst_9 [3] : vector<1x4x16x32xf32> to vector<1x4x16xf32>
    %89 = arith.mulf %88, %88 : vector<1x4x16xf32>
    %90 = math.absf %88 : vector<1x4x16xf32>
    %91 = arith.mulf %88, %90 : vector<1x4x16xf32>
    %cst_10 = arith.constant 1.000000e+00 : f32
    %92 = vector.broadcast %cst_10 : f32 to vector<1x4x16xf32>
    %93 = arith.addf %92, %89 : vector<1x4x16xf32>
    %94 = tpu.reciprocal %93 {approx = true} : vector<1x4x16xf32> -> vector<1x4x16xf32>
    %95 = arith.mulf %91, %94 : vector<1x4x16xf32>
    %cst_11 = arith.constant dense<0.000000e+00> : vector<1x4xf32>
    %96 = vector.multi_reduction <add>, %95, %cst_11 [2] : vector<1x4x16xf32> to vector<1x4xf32>
    %97 = vector.shape_cast %96 : vector<1x4xf32> to vector<1x4x1xf32>
    %98 = vector.broadcast %97 : vector<1x4x1xf32> to vector<1x4x32xf32>
    %99 = arith.mulf %84, %98 : vector<1x4x32xf32>
    %100 = arith.addf %75, %99 : vector<1x4x32xf32>
    %cst_12 = arith.constant dense<0xFF800000> : vector<1x32xf32>
    %101 = vector.multi_reduction <maximumf>, %100, %cst_12 [1] : vector<1x4x32xf32> to vector<1x32xf32>
    %102 = vector.shape_cast %101 : vector<1x32xf32> to vector<1x1x32xf32>
    %103 = vector.broadcast %102 : vector<1x1x32xf32> to vector<1x4x32xf32>
    %104 = arith.subf %100, %103 : vector<1x4x32xf32>
    %105 = math.exp %104 : vector<1x4x32xf32>
    %cst_13 = arith.constant dense<0.000000e+00> : vector<1x32xf32>
    %106 = vector.multi_reduction <add>, %105, %cst_13 [1] : vector<1x4x32xf32> to vector<1x32xf32>
    %107 = vector.shape_cast %106 : vector<1x32xf32> to vector<1x1x32xf32>
    %108 = vector.broadcast %107 : vector<1x1x32xf32> to vector<1x4x32xf32>
    %109 = arith.divf %105, %108 : vector<1x4x32xf32>
    %110 = vector.shape_cast %109 : vector<1x4x32xf32> to vector<1x4x1x32xf32>
    %111 = vector.broadcast %110 : vector<1x4x1x32xf32> to vector<1x4x16x32xf32>
    %112 = arith.mulf %111, %74 : vector<1x4x16x32xf32>
    %cst_14 = arith.constant dense<0.000000e+00> : vector<1x4x16xf32>
    %113 = vector.multi_reduction <add>, %112, %cst_14 [3] : vector<1x4x16x32xf32> to vector<1x4x16xf32>
    %114 = arith.mulf %113, %113 : vector<1x4x16xf32>
    %115 = math.absf %113 : vector<1x4x16xf32>
    %116 = arith.mulf %113, %115 : vector<1x4x16xf32>
    %cst_15 = arith.constant 1.000000e+00 : f32
    %117 = vector.broadcast %cst_15 : f32 to vector<1x4x16xf32>
    %118 = arith.addf %117, %114 : vector<1x4x16xf32>
    %119 = tpu.reciprocal %118 {approx = true} : vector<1x4x16xf32> -> vector<1x4x16xf32>
    %120 = arith.mulf %116, %119 : vector<1x4x16xf32>
    %cst_16 = arith.constant dense<0.000000e+00> : vector<1x4xf32>
    %121 = vector.multi_reduction <add>, %120, %cst_16 [2] : vector<1x4x16xf32> to vector<1x4xf32>
    %122 = vector.shape_cast %121 : vector<1x4xf32> to vector<1x4x1xf32>
    %123 = vector.broadcast %122 : vector<1x4x1xf32> to vector<1x4x32xf32>
    %124 = arith.mulf %109, %123 : vector<1x4x32xf32>
    %125 = arith.addf %100, %124 : vector<1x4x32xf32>
    %cst_17 = arith.constant dense<0xFF800000> : vector<1x32xf32>
    %126 = vector.multi_reduction <maximumf>, %125, %cst_17 [1] : vector<1x4x32xf32> to vector<1x32xf32>
    %127 = vector.shape_cast %126 : vector<1x32xf32> to vector<1x1x32xf32>
    %128 = vector.broadcast %127 : vector<1x1x32xf32> to vector<1x4x32xf32>
    %129 = arith.subf %125, %128 : vector<1x4x32xf32>
    %130 = math.exp %129 : vector<1x4x32xf32>
    %cst_18 = arith.constant dense<0.000000e+00> : vector<1x32xf32>
    %131 = vector.multi_reduction <add>, %130, %cst_18 [1] : vector<1x4x32xf32> to vector<1x32xf32>
    %132 = vector.shape_cast %131 : vector<1x32xf32> to vector<1x1x32xf32>
    %133 = vector.broadcast %132 : vector<1x1x32xf32> to vector<1x4x32xf32>
    %134 = arith.divf %130, %133 : vector<1x4x32xf32>
    %135 = vector.shape_cast %134 : vector<1x4x32xf32> to vector<1x4x1x32xf32>
    %136 = vector.broadcast %135 : vector<1x4x1x32xf32> to vector<1x4x16x32xf32>
    %137 = arith.mulf %136, %74 : vector<1x4x16x32xf32>
    %cst_19 = arith.constant dense<0.000000e+00> : vector<1x4x16xf32>
    %138 = vector.multi_reduction <add>, %137, %cst_19 [3] : vector<1x4x16x32xf32> to vector<1x4x16xf32>
    %139 = arith.mulf %138, %138 : vector<1x4x16xf32>
    %140 = math.absf %138 : vector<1x4x16xf32>
    %141 = arith.mulf %138, %140 : vector<1x4x16xf32>
    %cst_20 = arith.constant 1.000000e+00 : f32
    %142 = vector.broadcast %cst_20 : f32 to vector<1x4x16xf32>
    %143 = arith.addf %142, %139 : vector<1x4x16xf32>
    %144 = tpu.reciprocal %143 {approx = true} : vector<1x4x16xf32> -> vector<1x4x16xf32>
    %145 = arith.mulf %141, %144 : vector<1x4x16xf32>
    %c0_21 = arith.constant 0 : index
    %c0_22 = arith.constant 0 : index
    %c0_23 = arith.constant 0 : index
    %146 = vector.load %arg3[%c0_21, %c0_22, %c0_23] : memref<1x4x16xf32, #tpu.memory_space<vmem>>, vector<1x4x16xf32>
    tpu.vector_store %arg3[%c0_21, %c0_22, %c0_23], %145 {strides = array<i32>} : memref<1x4x16xf32, #tpu.memory_space<vmem>>, vector<1x4x16xf32>,
    return
  }
  func.func @transform_0(%arg0: i32) -> (i32, i32, i32) {
    %c0_i32 = arith.constant 0 : i32
    %c0_i32_0 = arith.constant 0 : i32
    %c0_i32_1 = arith.constant 0 : i32
    return %arg0, %c0_i32, %c0_i32_0 : i32, i32, i32
  }
  func.func @transform_1(%arg0: i32) -> (i32, i32, i32, i32) {
    %c0_i32 = arith.constant 0 : i32
    %c0_i32_0 = arith.constant 0 : i32
    %c0_i32_1 = arith.constant 0 : i32
    %c0_i32_2 = arith.constant 0 : i32
    %c0_i32_3 = arith.constant 0 : i32
    return %c0_i32, %c0_i32_0, %c0_i32_1, %c0_i32_2 : i32, i32, i32, i32
  }
  func.func @transform_2(%arg0: i32) -> (i32, i32, i32) {
    %c0_i32 = arith.constant 0 : i32
    %c0_i32_0 = arith.constant 0 : i32
    %c0_i32_1 = arith.constant 0 : i32
    return %arg0, %c0_i32, %c0_i32_0 : i32, i32, i32
  }
}

</mosaic_0001>

<llo_original>
// kernel: tpu_custom_call.1
$region0: #{tpu_custom_call.1}
  #allocation0 [shape = 'u32[]', space=smem, size = 0x4, offset = 0x4, fixed_abs, tag = 'smem constant byte address 0x4 - core index']
  #allocation1 [shape = 'u32[144,128]{1,0:T(1,128)}', space=vmem, size = 0x12000, scoped, tag = 'internal scratch']
  %s0 = inlined_call_operand.hbm [shape: f32[2,8,32], index: 0, kind: input, shape index: {}]
  %s1 = inlined_call_operand.hbm [shape: f32[4,8,16,32], index: 1, kind: input, shape index: {}]
  %s2 = inlined_call_operand.hbm [shape: f32[2,4,16], index: 2, kind: output, shape index: {}]
  %s3 = sld [smem:[#allocation0]]
  $region49: #{tpu_custom_call.1} parent=0
    _
  %s5 = ssub.s32 1, %s3
  %s6 = scalar_select 0, %s5, %s3
  $region1: #{tpu_custom_call.1} parent=0
    #allocation2 [shape = 'u8[8192]{0}', space=vmem, size = 0x2000, scoped, tag = 'input window, operand 0']
    #allocation3 [shape = 's32[2]{0}', space=sflag, size = 0x8, scoped, tag = 'scoped memory for tpu_custom_call.1']
    #allocation4 [shape = 's32[2]{0}', space=sflag, size = 0x8, scoped, tag = 'scoped memory for tpu_custom_call.1']
    #allocation5 [shape = 'u8[262144]{0}', space=vmem, size = 0x40000, scoped, tag = 'input window, operand 1, single buffered']
    #allocation6 [shape = 's32[1]{0}', space=sflag, size = 0x4, scoped, tag = 'scoped memory for tpu_custom_call.1']
    #allocation7 [shape = 'u8[4096]{0}', space=vmem, size = 0x1000, scoped, tag = 'output window, operand 0']
    %7 = vsyncpa [#allocation3], 0
    %s8 = scalar_lea.sflag [#allocation3], 1
    %9 = vsyncpa %s8, 0
    %10 = vsyncpa [#allocation6], 0
    %11 = vsyncpa [#allocation4], 0
    %s12 = scalar_lea.sflag [#allocation4], 1
    %13 = vsyncpa %s12, 0
    loop: start=0, step=1, limit=4
    $region2: #{tpu_custom_call.1} parent=1 // loop_pre_header
      _
    $region3: #{tpu_custom_call.1} parent=1 // loop_header
      %s15 = sphi 0, %s19
      %p16 = scmp.ge.s32.totalorder %s15, 4
      %s25 = sphi 0, %s27
      %s28 = sphi 0, %s25
      %s29 = sphi 0, %s28
      %s45 = sphi 0, %s29
      %s49 = sphi 0, %s49
      %s51 = sphi 0, %s49
      %s52 = sphi 0, %s51
      %s66 = sphi 0, %s52
      %s72 = sphi 0, %s74
      %s75 = sphi 0, %s72
      %s76 = sphi 0, %s75
      %s92 = sphi 0, %s76
    $region4: #{tpu_custom_call.1} parent=1 // loop_header_branch
      %18 = sbr.rel (%p16) target = $region8
    $region5: #{tpu_custom_call.1} parent=1 // loop_body
      %s20 = ssub.s32 %s15, 1
      %s21 = ssub.s32 %s15, 2
      %s22 = sadd.s32 %s15, 1
      %s23 = ssub.s32 %s15, %s22
      %p24 = scmp.eq.s32.totalorder %s23, 0
      %s26 = sadd.s32 %s25, 1
      %s27 = scalar_select %p24, %s25, %s26
      %p30 = pneg %p24
      %p31 = scmp.eq.s32.totalorder %s15, 1
      %p32 = por %p30, %p31
      %p33 = scmp.ne.s32.totalorder %s25, %s28
      %p34 = scmp.eq.s32.totalorder %s15, 0
      %p35 = por %p33, %p34
      %p36 = scmp.ne.s32.totalorder %s25, %s28
      %p37 = scmp.eq.s32.totalorder %s20, 1
      %p38 = por %p36, %p37
      %p39 = scmp.ne.s32.totalorder %s28, %s29
      %p40 = scmp.eq.s32.totalorder %s20, 0
      %p41 = por %p39, %p40
      %p42 = scmp.ne.s32.totalorder %s28, %s29
      %p43 = scmp.eq.s32.totalorder %s21, 1
      %p44 = por %p42, %p43
      %p46 = scmp.ne.s32.totalorder %s29, %s45
      %p47 = scmp.eq.s32.totalorder %s21, 0
      %p48 = por %p46, %p47
      %s50 = sadd.s32 %s49, 1
      %p53 = scmp.eq.s32.totalorder %s15, 1
      %p54 = scmp.ne.s32.totalorder %s49, %s51
      %p55 = scmp.eq.s32.totalorder %s15, 0
      %p56 = por %p54, %p55
      %p57 = scmp.ne.s32.totalorder %s49, %s51
      %p58 = scmp.eq.s32.totalorder %s20, 1
      %p59 = por %p57, %p58
      %p60 = scmp.ne.s32.totalorder %s51, %s52
      %p61 = scmp.eq.s32.totalorder %s20, 0
      %p62 = por %p60, %p61
      %p63 = scmp.ne.s32.totalorder %s51, %s52
      %p64 = scmp.eq.s32.totalorder %s21, 1
      %p65 = por %p63, %p64
      %p67 = scmp.ne.s32.totalorder %s52, %s66
      %p68 = scmp.eq.s32.totalorder %s21, 0
      %p69 = por %p67, %p68
      %s70 = ssub.s32 %s15, %s22
      %p71 = scmp.eq.s32.totalorder %s70, 0
      %s73 = sadd.s32 %s72, 1
      %s74 = scalar_select %p71, %s72, %s73
      %p77 = pneg %p71
      %p78 = scmp.eq.s32.totalorder %s15, 1
      %p79 = por %p77, %p78
      %p80 = scmp.ne.s32.totalorder %s72, %s75
      %p81 = scmp.eq.s32.totalorder %s15, 0
      %p82 = por %p80, %p81
      %p83 = scmp.ne.s32.totalorder %s72, %s75
      %p84 = scmp.eq.s32.totalorder %s20, 1
      %p85 = por %p83, %p84
      %p86 = scmp.ne.s32.totalorder %s75, %s76
      %p87 = scmp.eq.s32.totalorder %s20, 0
      %p88 = por %p86, %p87
      %p89 = scmp.ne.s32.totalorder %s75, %s76
      %p90 = scmp.eq.s32.totalorder %s21, 1
      %p91 = por %p89, %p90
      %p93 = scmp.ne.s32.totalorder %s76, %s92
      %p94 = scmp.eq.s32.totalorder %s21, 0
      %p95 = por %p93, %p94
      %p96 = scmp.le.s32.totalorder 1, %s15
      %p97 = scmp.lt.s32.totalorder %s15, 3
      %p98 = pnand %p96, %p97
      %p99 = pneg %p98
      // Predicated region
      $region9: #{tpu_custom_call.1} parent=5 // pred_check
        _
      $region10: #{tpu_custom_call.1} parent=5 // pred_check_branch
        %101 = sbr.rel (%p98) target = $region12
      $region11: #{tpu_custom_call.1} parent=5 // pred_region
        %s102 = ssub.s32 %s15, 1
        // Predicated region
        $region13: #{tpu_custom_call.1} parent=11 // pred_check
          %p103 = pneg %p62
        $region14: #{tpu_custom_call.1} parent=11 // pred_check_branch
          %105 = sbr.rel (%p103) target = $region16
        $region15: #{tpu_custom_call.1} parent=11 // pred_region
          %s107 = ssub.s32 8192, 8192
          %108 = vsyncadd [#allocation6], %s107
          %s109 = sshll.u32 [#allocation5], 4
          %s110 = int_to_ptr.vmem [resolvable:$true] %s109
          %115 = dma.hbm_to_vmem [thread:$0]  %s1, 8192, %s110, [#allocation6], 128, 128, 8
        $region16: #{tpu_custom_call.1} parent=11 // pred_fallthru
          _
      $region12: #{tpu_custom_call.1} parent=5 // pred_fallthru
        _
      %p116 = scmp.lt.s32.totalorder %s15, 2
      // Predicated region
      $region17: #{tpu_custom_call.1} parent=5 // pred_check
        %p117 = pneg %p116
      $region18: #{tpu_custom_call.1} parent=5 // pred_check_branch
        %119 = sbr.rel (%p117) target = $region20
      $region19: #{tpu_custom_call.1} parent=5 // pred_region
        // Predicated region
        $region21: #{tpu_custom_call.1} parent=19 // pred_check
          %p120 = pneg %p35
        $region22: #{tpu_custom_call.1} parent=19 // pred_check_branch
          %122 = sbr.rel (%p120) target = $region24
        $region23: #{tpu_custom_call.1} parent=19 // pred_region
          %s123 = sand.u32 %s25, 1
          %s124 = scalar_lea.sflag [#allocation3], %s123
          %s125 = sand.u32 %s25, 1
          %s126 = smul.addr %s125, 8
          %s127 = scalar_lea.vmem [#allocation2], %s126
          %s129 = ssub.s32 128, 128
          %130 = vsyncadd %s124, %s129
          %s131 = smul.addr %s15, 128
          %s132 = scalar_lea.hbm %s0, %s131
          %s134 = sshll.u32 %s127, 4
          %s135 = int_to_ptr.vmem [resolvable:$true] %s134
          %137 = dma.hbm_to_vmem [thread:$0]  %s132, 128, %s135, %s124
        $region24: #{tpu_custom_call.1} parent=19 // pred_fallthru
          _
      $region20: #{tpu_custom_call.1} parent=5 // pred_fallthru
        _
      %p138 = scmp.le.s32.totalorder 1, %s15
      %p139 = scmp.lt.s32.totalorder %s15, 3
      %p140 = pnand %p138, %p139
      %p141 = pneg %p140
      // Predicated region
      $region25: #{tpu_custom_call.1} parent=5 // pred_check
        _
      $region26: #{tpu_custom_call.1} parent=5 // pred_check_branch
        %143 = sbr.rel (%p140) target = $region28
      $region27: #{tpu_custom_call.1} parent=5 // pred_region
        %s144 = ssub.s32 %s15, 1
        %s145 = sand.u32 %s28, 1
        %s146 = scalar_lea.sflag [#allocation3], %s145
        %s147 = sand.u32 %s28, 1
        %s148 = smul.addr %s147, 8
        %s149 = scalar_lea.vmem [#allocation2], %s148
        // Predicated region
        $region29: #{tpu_custom_call.1} parent=27 // pred_check
          %p150 = pneg %p41
        $region30: #{tpu_custom_call.1} parent=27 // pred_check_branch
          %152 = sbr.rel (%p150) target = $region32
        $region31: #{tpu_custom_call.1} parent=27 // pred_region
          %153 = dma.done %s146, 128
        $region32: #{tpu_custom_call.1} parent=27 // pred_fallthru
          _
        // Predicated region
        $region33: #{tpu_custom_call.1} parent=27 // pred_check
          %p154 = pneg %p62
        $region34: #{tpu_custom_call.1} parent=27 // pred_check_branch
          %156 = sbr.rel (%p154) target = $region36
        $region35: #{tpu_custom_call.1} parent=27 // pred_region
          %157 = dma.done [#allocation6], 8192
        $region36: #{tpu_custom_call.1} parent=27 // pred_fallthru
          _
        %s158 = sand.u32 %s28, 1
        %s159 = scalar_lea.sflag [#allocation3], %s158
        %s160 = sand.u32 %s28, 1
        %s161 = smul.addr %s160, 8
        %s162 = scalar_lea.vmem [#allocation2], %s161
        %p163 = pneg %p41
        %p164 = pneg %p38
        %p165 = pneg %p62
        %p166 = pneg %p59
        %p167 = pneg %p88
        %p168 = pneg %p85
        %s169 = sand.u32 %s75, 1
        %s170 = scalar_lea.sflag [#allocation4], %s169
        %s171 = sand.u32 %s75, 1
        %s172 = smul.addr %s171, 4
        %s173 = scalar_lea.vmem [#allocation7], %s172
        %v174 = vld [vmem:[%s149] sm:$0xff]
        %v175 = vld [vmem:[#allocation5] sm:$0xff]
        %v176 = vld [vmem:[#allocation5 + $0x8] sm:$0xff]
        %v177 = vld [vmem:[#allocation5 + $0x10] sm:$0xff]
        %v178 = vld [vmem:[#allocation5 + $0x18] sm:$0xff]
        %v179 = vld [vmem:[#allocation5 + $0x20] sm:$0xff]
        %v180 = vld [vmem:[#allocation5 + $0x28] sm:$0xff]
        %v181 = vld [vmem:[#allocation5 + $0x30] sm:$0xff]
        %v182 = vld [vmem:[#allocation5 + $0x38] sm:$0xff]
        %v183 = vld [vmem:[#allocation5 + $0x40] sm:$0xff]
        %v184 = vld [vmem:[#allocation5 + $0x48] sm:$0xff]
        %v185 = vld [vmem:[#allocation5 + $0x50] sm:$0xff]
        %v186 = vld [vmem:[#allocation5 + $0x58] sm:$0xff]
        %v187 = vld [vmem:[#allocation5 + $0x60] sm:$0xff]
        %v188 = vld [vmem:[#allocation5 + $0x68] sm:$0xff]
        %v189 = vld [vmem:[#allocation5 + $0x70] sm:$0xff]
        %v190 = vld [vmem:[#allocation5 + $0x78] sm:$0xff]
        %v191 = vld [vmem:[#allocation5 + $0x80] sm:$0xff]
        %v192 = vld [vmem:[#allocation5 + $0x88] sm:$0xff]
        %v193 = vld [vmem:[#allocation5 + $0x90] sm:$0xff]
        %v194 = vld [vmem:[#allocation5 + $0x98] sm:$0xff]
        %v195 = vld [vmem:[#allocation5 + $0xa0] sm:$0xff]
        %v196 = vld [vmem:[#allocation5 + $0xa8] sm:$0xff]
        %v197 = vld [vmem:[#allocation5 + $0xb0] sm:$0xff]
        %v198 = vld [vmem:[#allocation5 + $0xb8] sm:$0xff]
        %v199 = vld [vmem:[#allocation5 + $0xc0] sm:$0xff]
        %v200 = vld [vmem:[#allocation5 + $0xc8] sm:$0xff]
        %v201 = vld [vmem:[#allocation5 + $0xd0] sm:$0xff]
        %v202 = vld [vmem:[#allocation5 + $0xd8] sm:$0xff]
        %v203 = vld [vmem:[#allocation5 + $0xe0] sm:$0xff]
        %v204 = vld [vmem:[#allocation5 + $0xe8] sm:$0xff]
        %v205 = vld [vmem:[#allocation5 + $0xf0] sm:$0xff]
        %v206 = vld [vmem:[#allocation5 + $0xf8] sm:$0xff]
        %v207 = vld [vmem:[#allocation5 + $0x100] sm:$0xff]
        %v208 = vld [vmem:[#allocation5 + $0x108] sm:$0xff]
        %v209 = vld [vmem:[#allocation5 + $0x110] sm:$0xff]
        %v210 = vld [vmem:[#allocation5 + $0x118] sm:$0xff]
        %v211 = vld [vmem:[#allocation5 + $0x120] sm:$0xff]
        %v212 = vld [vmem:[#allocation5 + $0x128] sm:$0xff]
        %v213 = vld [vmem:[#allocation5 + $0x130] sm:$0xff]
        %v214 = vld [vmem:[#allocation5 + $0x138] sm:$0xff]
        %v215 = vld [vmem:[#allocation5 + $0x140] sm:$0xff]
        %v216 = vld [vmem:[#allocation5 + $0x148] sm:$0xff]
        %v217 = vld [vmem:[#allocation5 + $0x150] sm:$0xff]
        %v218 = vld [vmem:[#allocation5 + $0x158] sm:$0xff]
        %v219 = vld [vmem:[#allocation5 + $0x160] sm:$0xff]
        %v220 = vld [vmem:[#allocation5 + $0x168] sm:$0xff]
        %v221 = vld [vmem:[#allocation5 + $0x170] sm:$0xff]
        %v222 = vld [vmem:[#allocation5 + $0x178] sm:$0xff]
        %v223 = vld [vmem:[#allocation5 + $0x180] sm:$0xff]
        %v224 = vld [vmem:[#allocation5 + $0x188] sm:$0xff]
        %v225 = vld [vmem:[#allocation5 + $0x190] sm:$0xff]
        %v226 = vld [vmem:[#allocation5 + $0x198] sm:$0xff]
        %v227 = vld [vmem:[#allocation5 + $0x1a0] sm:$0xff]
        %v228 = vld [vmem:[#allocation5 + $0x1a8] sm:$0xff]
        %v229 = vld [vmem:[#allocation5 + $0x1b0] sm:$0xff]
        %v230 = vld [vmem:[#allocation5 + $0x1b8] sm:$0xff]
        %v231 = vld [vmem:[#allocation5 + $0x1c0] sm:$0xff]
        %v232 = vld [vmem:[#allocation5 + $0x1c8] sm:$0xff]
        %v233 = vld [vmem:[#allocation5 + $0x1d0] sm:$0xff]
        %v234 = vld [vmem:[#allocation5 + $0x1d8] sm:$0xff]
        %v235 = vld [vmem:[#allocation5 + $0x1e0] sm:$0xff]
        %v236 = vld [vmem:[#allocation5 + $0x1e8] sm:$0xff]
        %v237 = vld [vmem:[#allocation5 + $0x1f0] sm:$0xff]
        %v238 = vld [vmem:[#allocation5 + $0x1f8] sm:$0xff]
        %v239 = vlaneseq
        %v240 = vshrl.u32 %v239, 7
        %v241 = vsub.s32 0, %v240
        %v242 = vrot.slane %v174, %v241
        %v243 = vmul.f32 %v242, %v175
        %v244 = vmul.f32 %v242, %v176
        %v245 = vmul.f32 %v242, %v191
        %v246 = vmul.f32 %v242, %v192
        %v247 = vmul.f32 %v242, %v207
        %v248 = vmul.f32 %v242, %v208
        %v249 = vmul.f32 %v242, %v223
        %v250 = vmul.f32 %v242, %v224
        %v251 = vadd.f32 %v243, 0.0
        %v252 = vadd.f32 %v244, 0.0
        %v253 = vadd.f32 %v245, 0.0
        %v254 = vadd.f32 %v246, 0.0
        %v255 = vadd.f32 %v247, 0.0
        %v256 = vadd.f32 %v248, 0.0
        %v257 = vadd.f32 %v249, 0.0
        %v258 = vadd.f32 %v250, 0.0
        %v259 = vlaneseq
        %v260 = vshrl.u32 %v259, 7
        %v261 = vsub.s32 1, %v260
        %v262 = vrot.slane %v174, %v261
        %v263 = vmul.f32 %v262, %v177
        %v264 = vmul.f32 %v262, %v178
        %v265 = vmul.f32 %v262, %v193
        %v266 = vmul.f32 %v262, %v194
        %v267 = vmul.f32 %v262, %v209
        %v268 = vmul.f32 %v262, %v210
        %v269 = vmul.f32 %v262, %v225
        %v270 = vmul.f32 %v262, %v226
        %v271 = vadd.f32 %v251, %v263
        %v272 = vadd.f32 %v252, %v264
        %v273 = vadd.f32 %v253, %v265
        %v274 = vadd.f32 %v254, %v266
        %v275 = vadd.f32 %v255, %v267
        %v276 = vadd.f32 %v256, %v268
        %v277 = vadd.f32 %v257, %v269
        %v278 = vadd.f32 %v258, %v270
        %v279 = vlaneseq
        %v280 = vshrl.u32 %v279, 7
        %v281 = vsub.s32 2, %v280
        %v282 = vrot.slane %v174, %v281
        %v283 = vmul.f32 %v282, %v179
        %v284 = vmul.f32 %v282, %v180
        %v285 = vmul.f32 %v282, %v195
        %v286 = vmul.f32 %v282, %v196
        %v287 = vmul.f32 %v282, %v211
        %v288 = vmul.f32 %v282, %v212
        %v289 = vmul.f32 %v282, %v227
        %v290 = vmul.f32 %v282, %v228
        %v291 = vadd.f32 %v271, %v283
        %v292 = vadd.f32 %v272, %v284
        %v293 = vadd.f32 %v273, %v285
        %v294 = vadd.f32 %v274, %v286
        %v295 = vadd.f32 %v275, %v287
        %v296 = vadd.f32 %v276, %v288
        %v297 = vadd.f32 %v277, %v289
        %v298 = vadd.f32 %v278, %v290
        %v299 = vlaneseq
        %v300 = vshrl.u32 %v299, 7
        %v301 = vsub.s32 3, %v300
        %v302 = vrot.slane %v174, %v301
        %v303 = vmul.f32 %v302, %v181
        %v304 = vmul.f32 %v302, %v182
        %v305 = vmul.f32 %v302, %v197
        %v306 = vmul.f32 %v302, %v198
        %v307 = vmul.f32 %v302, %v213
        %v308 = vmul.f32 %v302, %v214
        %v309 = vmul.f32 %v302, %v229
        %v310 = vmul.f32 %v302, %v230
        %v311 = vadd.f32 %v291, %v303
        %v312 = vadd.f32 %v292, %v304
        %v313 = vadd.f32 %v293, %v305
        %v314 = vadd.f32 %v294, %v306
        %v315 = vadd.f32 %v295, %v307
        %v316 = vadd.f32 %v296, %v308
        %v317 = vadd.f32 %v297, %v309
        %v318 = vadd.f32 %v298, %v310
        %v319 = vlaneseq
        %v320 = vshrl.u32 %v319, 7
        %v321 = vsub.s32 4, %v320
        %v322 = vrot.slane %v174, %v321
        %v323 = vmul.f32 %v322, %v183
        %v324 = vmul.f32 %v322, %v184
        %v325 = vmul.f32 %v322, %v199
        %v326 = vmul.f32 %v322, %v200
        %v327 = vmul.f32 %v322, %v215
        %v328 = vmul.f32 %v322, %v216
        %v329 = vmul.f32 %v322, %v231
        %v330 = vmul.f32 %v322, %v232
        %v331 = vadd.f32 %v311, %v323
        %v332 = vadd.f32 %v312, %v324
        %v333 = vadd.f32 %v313, %v325
        %v334 = vadd.f32 %v314, %v326
        %v335 = vadd.f32 %v315, %v327
        %v336 = vadd.f32 %v316, %v328
        %v337 = vadd.f32 %v317, %v329
        %v338 = vadd.f32 %v318, %v330
        %v339 = vlaneseq
        %v340 = vshrl.u32 %v339, 7
        %v341 = vsub.s32 5, %v340
        %v342 = vrot.slane %v174, %v341
        %v343 = vmul.f32 %v342, %v185
        %v344 = vmul.f32 %v342, %v186
        %v345 = vmul.f32 %v342, %v201
        %v346 = vmul.f32 %v342, %v202
        %v347 = vmul.f32 %v342, %v217
        %v348 = vmul.f32 %v342, %v218
        %v349 = vmul.f32 %v342, %v233
        %v350 = vmul.f32 %v342, %v234
        %v351 = vadd.f32 %v331, %v343
        %v352 = vadd.f32 %v332, %v344
        %v353 = vadd.f32 %v333, %v345
        %v354 = vadd.f32 %v334, %v346
        %v355 = vadd.f32 %v335, %v347
        %v356 = vadd.f32 %v336, %v348
        %v357 = vadd.f32 %v337, %v349
        %v358 = vadd.f32 %v338, %v350
        %v359 = vlaneseq
        %v360 = vshrl.u32 %v359, 7
        %v361 = vsub.s32 6, %v360
        %v362 = vrot.slane %v174, %v361
        %v363 = vmul.f32 %v362, %v187
        %v364 = vmul.f32 %v362, %v188
        %v365 = vmul.f32 %v362, %v203
        %v366 = vmul.f32 %v362, %v204
        %v367 = vmul.f32 %v362, %v219
        %v368 = vmul.f32 %v362, %v220
        %v369 = vmul.f32 %v362, %v235
        %v370 = vmul.f32 %v362, %v236
        %v371 = vadd.f32 %v351, %v363
        %v372 = vadd.f32 %v352, %v364
        %v373 = vadd.f32 %v353, %v365
        %v374 = vadd.f32 %v354, %v366
        %v375 = vadd.f32 %v355, %v367
        %v376 = vadd.f32 %v356, %v368
        %v377 = vadd.f32 %v357, %v369
        %v378 = vadd.f32 %v358, %v370
        %v379 = vlaneseq
        %v380 = vshrl.u32 %v379, 7
        %v381 = vsub.s32 7, %v380
        %v382 = vrot.slane %v174, %v381
        %v383 = vmul.f32 %v382, %v189
        %v384 = vmul.f32 %v382, %v190
        %v385 = vmul.f32 %v382, %v205
        %v386 = vmul.f32 %v382, %v206
        %v387 = vmul.f32 %v382, %v221
        %v388 = vmul.f32 %v382, %v222
        %v389 = vmul.f32 %v382, %v237
        %v390 = vmul.f32 %v382, %v238
        %v391 = vadd.f32 %v371, %v383
        %v392 = vadd.f32 %v372, %v384
        %v393 = vadd.f32 %v373, %v385
        %v394 = vadd.f32 %v374, %v386
        %v395 = vadd.f32 %v375, %v387
        %v396 = vadd.f32 %v376, %v388
        %v397 = vadd.f32 %v377, %v389
        %v398 = vadd.f32 %v378, %v390
        %vm399 = vcmask 1043456
        %v400 = vsel %vm399, 1.0, 0.0
        %v401 = vrot.slane %v400, 4
        %v402 = vadd.f32 %v400, %v401
        %v403 = vrot.slane %v402, 2
        %v404 = vadd.f32 %v402, %v403
        %v405 = vrot.slane %v404, 1
        %v406 = vadd.f32 %v404, %v405
        %v407 = vrcp.pop %v406
        %v408 = vmul.f32 1.0, %v407
        %v409 = vmul.f32 %v408, %v391
        %v410 = vmul.f32 %v408, %v392
        %v411 = vmul.f32 %v408, %v393
        %v412 = vmul.f32 %v408, %v394
        %v413 = vmul.f32 %v408, %v395
        %v414 = vmul.f32 %v408, %v396
        %v415 = vmul.f32 %v408, %v397
        %v416 = vmul.f32 %v408, %v398
        %vm417 = vcmask 261120
        %v418 = vsel %vm417, %v409, 0.0
        %419 = vadd.xlane.f32.xlu0 %v418
        %v420 = vpop.xlane.xlu0 %419
        %v421 = vsel %vm417, %v410, 0.0
        %422 = vadd.xlane.f32.xlu0 %v421
        %v423 = vpop.xlane.xlu0 %422
        %v424 = vsel %vm417, %v411, 0.0
        %425 = vadd.xlane.f32.xlu0 %v424
        %v426 = vpop.xlane.xlu0 %425
        %v427 = vsel %vm417, %v412, 0.0
        %428 = vadd.xlane.f32.xlu0 %v427
        %v429 = vpop.xlane.xlu0 %428
        %v430 = vsel %vm417, %v413, 0.0
        %431 = vadd.xlane.f32.xlu0 %v430
        %v432 = vpop.xlane.xlu0 %431
        %v433 = vsel %vm417, %v414, 0.0
        %434 = vadd.xlane.f32.xlu0 %v433
        %v435 = vpop.xlane.xlu0 %434
        %v436 = vsel %vm417, %v415, 0.0
        %437 = vadd.xlane.f32.xlu0 %v436
        %v438 = vpop.xlane.xlu0 %437
        %v439 = vsel %vm417, %v416, 0.0
        %440 = vadd.xlane.f32.xlu0 %v439
        %v441 = vpop.xlane.xlu0 %440
        %v442 = vmul.f32 %v420, %v420
        %v443 = vmul.f32 %v423, %v423
        %v444 = vmul.f32 %v426, %v426
        %v445 = vmul.f32 %v429, %v429
        %v446 = vmul.f32 %v432, %v432
        %v447 = vmul.f32 %v435, %v435
        %v448 = vmul.f32 %v438, %v438
        %v449 = vmul.f32 %v441, %v441
        %v450 = vand.u32 2147483647, %v420
        %v451 = vand.u32 2147483647, %v423
        %v452 = vand.u32 2147483647, %v426
        %v453 = vand.u32 2147483647, %v429
        %v454 = vand.u32 2147483647, %v432
        %v455 = vand.u32 2147483647, %v435
        %v456 = vand.u32 2147483647, %v438
        %v457 = vand.u32 2147483647, %v441
        %v458 = vmul.f32 %v420, %v450
        %v459 = vmul.f32 %v423, %v451
        %v460 = vmul.f32 %v426, %v452
        %v461 = vmul.f32 %v429, %v453
        %v462 = vmul.f32 %v432, %v454
        %v463 = vmul.f32 %v435, %v455
        %v464 = vmul.f32 %v438, %v456
        %v465 = vmul.f32 %v441, %v457
        %v466 = vadd.f32 %v442, 1.0
        %v467 = vadd.f32 %v443, 1.0
        %v468 = vadd.f32 %v444, 1.0
        %v469 = vadd.f32 %v445, 1.0
        %v470 = vadd.f32 %v446, 1.0
        %v471 = vadd.f32 %v447, 1.0
        %v472 = vadd.f32 %v448, 1.0
        %v473 = vadd.f32 %v449, 1.0
        %v474 = vrcp.pop %v466
        %v475 = vrcp.pop %v467
        %v476 = vrcp.pop %v468
        %v477 = vrcp.pop %v469
        %v478 = vrcp.pop %v470
        %v479 = vrcp.pop %v471
        %v480 = vrcp.pop %v472
        %v481 = vrcp.pop %v473
        %v482 = vmul.f32 %v458, %v474
        %v483 = vmul.f32 %v459, %v475
        %v484 = vmul.f32 %v460, %v476
        %v485 = vmul.f32 %v461, %v477
        %v486 = vmul.f32 %v462, %v478
        %v487 = vmul.f32 %v463, %v479
        %v488 = vmul.f32 %v464, %v480
        %v489 = vmul.f32 %v465, %v481
        %v498 = vlaneseq
        %v499 = vand.u32 %v498, 127
        %v500 = vlaneseq
        %v501 = vshrl.u32 %v500, 7
        %v502 = vsub.s32 %v499, %v501
        %v503 = vrot.slane %v482, %v502
        %v504 = vadd.s32 %v499, 4294967288
        %v505 = vlaneseq
        %v506 = vshrl.u32 %v505, 7
        %v507 = vsub.s32 %v504, %v506
        %v508 = vrot.slane %v483, %v507
        %vm509 = vcmask 130112
        %v510 = vsel %vm509, %v508, %v503
        %v511 = vlaneseq
        %v512 = vshrl.u32 %v511, 7
        %v513 = vsub.s32 %v499, %v512
        %v514 = vrot.slane %v484, %v513
        %v515 = vlaneseq
        %v516 = vshrl.u32 %v515, 7
        %v517 = vsub.s32 %v504, %v516
        %v518 = vrot.slane %v485, %v517
        %v519 = vsel %vm509, %v518, %v514
        %v520 = vlaneseq
        %v521 = vshrl.u32 %v520, 7
        %v522 = vsub.s32 %v499, %v521
        %v523 = vrot.slane %v486, %v522
        %v524 = vlaneseq
        %v525 = vshrl.u32 %v524, 7
        %v526 = vsub.s32 %v504, %v525
        %v527 = vrot.slane %v487, %v526
        %v528 = vsel %vm509, %v527, %v523
        %v529 = vlaneseq
        %v530 = vshrl.u32 %v529, 7
        %v531 = vsub.s32 %v499, %v530
        %v532 = vrot.slane %v488, %v531
        %v533 = vlaneseq
        %v534 = vshrl.u32 %v533, 7
        %v535 = vsub.s32 %v504, %v534
        %v536 = vrot.slane %v489, %v535
        %v537 = vsel %vm509, %v536, %v532
        %vm538 = vcmask 1041409
        %v539 = vsel %vm538, %v519, %v510
        %vm540 = vcmask 1042434
        %v541 = vsel %vm540, %v528, %v539
        %vm542 = vcmask 1043459
        %v543 = vsel %vm542, %v537, %v541
        %vm545 = vcmask 125952
        %v546 = vsel %vm545, %v543, 0.0
        %547 = vadd.xlane.f32.xlu0 %v546
        %v548 = vpop.xlane.xlu0 %547
        %v549 = vmul.f32 %v408, %v548
        %v550 = vadd.f32 %v549, 0.0
        %v551 = vsel %vm399, %v550, -inf
        %v552 = vrot.slane %v551, 4
        %v553 = vmax.f32 %v551, %v552
        %v554 = vrot.slane %v553, 2
        %v555 = vmax.f32 %v553, %v554
        %v556 = vrot.slane %v555, 1
        %v557 = vmax.f32 %v555, %v556
        %v558 = vsub.f32 %v550, %v557
        %v559 = vmul.f32 %v558, 1.442695
        %v560 = vpow.pop %v559
        %v561 = vsel %vm399, %v560, 0.0
        %v562 = vrot.slane %v561, 4
        %v563 = vadd.f32 %v561, %v562
        %v564 = vrot.slane %v563, 2
        %v565 = vadd.f32 %v563, %v564
        %v566 = vrot.slane %v565, 1
        %v567 = vadd.f32 %v565, %v566
        %v568 = vrcp.pop %v567
        %v569 = vmul.f32 %v560, %v568
        %v571 = vlaneseq
        %v572 = vshrl.u32 %v571, 7
        %v573 = vsub.s32 0, %v572
        %v574 = vrot.slane %v569, %v573
        %v575 = vlaneseq
        %v576 = vshrl.u32 %v575, 7
        %v577 = vsub.s32 1, %v576
        %v578 = vrot.slane %v569, %v577
        %v579 = vlaneseq
        %v580 = vshrl.u32 %v579, 7
        %v581 = vsub.s32 2, %v580
        %v582 = vrot.slane %v569, %v581
        %v583 = vlaneseq
        %v584 = vshrl.u32 %v583, 7
        %v585 = vsub.s32 3, %v584
        %v586 = vrot.slane %v569, %v585
        %v591 = vmul.f32 %v574, %v391
        %v592 = vmul.f32 %v574, %v392
        %v593 = vmul.f32 %v578, %v393
        %v594 = vmul.f32 %v578, %v394
        %v595 = vmul.f32 %v582, %v395
        %v596 = vmul.f32 %v582, %v396
        %v597 = vmul.f32 %v586, %v397
        %v598 = vmul.f32 %v586, %v398
        %v599 = vsel %vm417, %v591, 0.0
        %600 = vadd.xlane.f32.xlu0 %v599
        %v601 = vpop.xlane.xlu0 %600
        %v602 = vsel %vm417, %v592, 0.0
        %603 = vadd.xlane.f32.xlu0 %v602
        %v604 = vpop.xlane.xlu0 %603
        %v605 = vsel %vm417, %v593, 0.0
        %606 = vadd.xlane.f32.xlu0 %v605
        %v607 = vpop.xlane.xlu0 %606
        %v608 = vsel %vm417, %v594, 0.0
        %609 = vadd.xlane.f32.xlu0 %v608
        %v610 = vpop.xlane.xlu0 %609
        %v611 = vsel %vm417, %v595, 0.0
        %612 = vadd.xlane.f32.xlu0 %v611
        %v613 = vpop.xlane.xlu0 %612
        %v614 = vsel %vm417, %v596, 0.0
        %615 = vadd.xlane.f32.xlu0 %v614
        %v616 = vpop.xlane.xlu0 %615
        %v617 = vsel %vm417, %v597, 0.0
        %618 = vadd.xlane.f32.xlu0 %v617
        %v619 = vpop.xlane.xlu0 %618
        %v620 = vsel %vm417, %v598, 0.0
        %621 = vadd.xlane.f32.xlu0 %v620
        %v622 = vpop.xlane.xlu0 %621
        %v623 = vmul.f32 %v601, %v601
        %v624 = vmul.f32 %v604, %v604
        %v625 = vmul.f32 %v607, %v607
        %v626 = vmul.f32 %v610, %v610
        %v627 = vmul.f32 %v613, %v613
        %v628 = vmul.f32 %v616, %v616
        %v629 = vmul.f32 %v619, %v619
        %v630 = vmul.f32 %v622, %v622
        %v631 = vand.u32 2147483647, %v601
        %v632 = vand.u32 2147483647, %v604
        %v633 = vand.u32 2147483647, %v607
        %v634 = vand.u32 2147483647, %v610
        %v635 = vand.u32 2147483647, %v613
        %v636 = vand.u32 2147483647, %v616
        %v637 = vand.u32 2147483647, %v619
        %v638 = vand.u32 2147483647, %v622
        %v639 = vmul.f32 %v601, %v631
        %v640 = vmul.f32 %v604, %v632
        %v641 = vmul.f32 %v607, %v633
        %v642 = vmul.f32 %v610, %v634
        %v643 = vmul.f32 %v613, %v635
        %v644 = vmul.f32 %v616, %v636
        %v645 = vmul.f32 %v619, %v637
        %v646 = vmul.f32 %v622, %v638
        %v647 = vadd.f32 %v623, 1.0
        %v648 = vadd.f32 %v624, 1.0
        %v649 = vadd.f32 %v625, 1.0
        %v650 = vadd.f32 %v626, 1.0
        %v651 = vadd.f32 %v627, 1.0
        %v652 = vadd.f32 %v628, 1.0
        %v653 = vadd.f32 %v629, 1.0
        %v654 = vadd.f32 %v630, 1.0
        %v655 = vrcp.pop %v647
        %v656 = vrcp.pop %v648
        %v657 = vrcp.pop %v649
        %v658 = vrcp.pop %v650
        %v659 = vrcp.pop %v651
        %v660 = vrcp.pop %v652
        %v661 = vrcp.pop %v653
        %v662 = vrcp.pop %v654
        %v663 = vmul.f32 %v639, %v655
        %v664 = vmul.f32 %v640, %v656
        %v665 = vmul.f32 %v641, %v657
        %v666 = vmul.f32 %v642, %v658
        %v667 = vmul.f32 %v643, %v659
        %v668 = vmul.f32 %v644, %v660
        %v669 = vmul.f32 %v645, %v661
        %v670 = vmul.f32 %v646, %v662
        %v679 = vlaneseq
        %v680 = vshrl.u32 %v679, 7
        %v681 = vsub.s32 %v499, %v680
        %v682 = vrot.slane %v663, %v681
        %v683 = vlaneseq
        %v684 = vshrl.u32 %v683, 7
        %v685 = vsub.s32 %v504, %v684
        %v686 = vrot.slane %v664, %v685
        %v687 = vsel %vm509, %v686, %v682
        %v688 = vlaneseq
        %v689 = vshrl.u32 %v688, 7
        %v690 = vsub.s32 %v499, %v689
        %v691 = vrot.slane %v665, %v690
        %v692 = vlaneseq
        %v693 = vshrl.u32 %v692, 7
        %v694 = vsub.s32 %v504, %v693
        %v695 = vrot.slane %v666, %v694
        %v696 = vsel %vm509, %v695, %v691
        %v697 = vlaneseq
        %v698 = vshrl.u32 %v697, 7
        %v699 = vsub.s32 %v499, %v698
        %v700 = vrot.slane %v667, %v699
        %v701 = vlaneseq
        %v702 = vshrl.u32 %v701, 7
        %v703 = vsub.s32 %v504, %v702
        %v704 = vrot.slane %v668, %v703
        %v705 = vsel %vm509, %v704, %v700
        %v706 = vlaneseq
        %v707 = vshrl.u32 %v706, 7
        %v708 = vsub.s32 %v499, %v707
        %v709 = vrot.slane %v669, %v708
        %v710 = vlaneseq
        %v711 = vshrl.u32 %v710, 7
        %v712 = vsub.s32 %v504, %v711
        %v713 = vrot.slane %v670, %v712
        %v714 = vsel %vm509, %v713, %v709
        %v715 = vsel %vm538, %v696, %v687
        %v716 = vsel %vm540, %v705, %v715
        %v717 = vsel %vm542, %v714, %v716
        %v719 = vsel %vm545, %v717, 0.0
        %720 = vadd.xlane.f32.xlu0 %v719
        %v721 = vpop.xlane.xlu0 %720
        %v722 = vmul.f32 %v569, %v721
        %v723 = vadd.f32 %v550, %v722
        %v724 = vsel %vm399, %v723, -inf
        %v725 = vrot.slane %v724, 4
        %v726 = vmax.f32 %v724, %v725
        %v727 = vrot.slane %v726, 2
        %v728 = vmax.f32 %v726, %v727
        %v729 = vrot.slane %v728, 1
        %v730 = vmax.f32 %v728, %v729
        %v731 = vsub.f32 %v723, %v730
        %v732 = vmul.f32 %v731, 1.442695
        %v733 = vpow.pop %v732
        %v734 = vsel %vm399, %v733, 0.0
        %v735 = vrot.slane %v734, 4
        %v736 = vadd.f32 %v734, %v735
        %v737 = vrot.slane %v736, 2
        %v738 = vadd.f32 %v736, %v737
        %v739 = vrot.slane %v738, 1
        %v740 = vadd.f32 %v738, %v739
        %v741 = vrcp.pop %v740
        %v742 = vmul.f32 %v733, %v741
        %v744 = vlaneseq
        %v745 = vshrl.u32 %v744, 7
        %v746 = vsub.s32 0, %v745
        %v747 = vrot.slane %v742, %v746
        %v748 = vlaneseq
        %v749 = vshrl.u32 %v748, 7
        %v750 = vsub.s32 1, %v749
        %v751 = vrot.slane %v742, %v750
        %v752 = vlaneseq
        %v753 = vshrl.u32 %v752, 7
        %v754 = vsub.s32 2, %v753
        %v755 = vrot.slane %v742, %v754
        %v756 = vlaneseq
        %v757 = vshrl.u32 %v756, 7
        %v758 = vsub.s32 3, %v757
        %v759 = vrot.slane %v742, %v758
        %v764 = vmul.f32 %v747, %v391
        %v765 = vmul.f32 %v747, %v392
        %v766 = vmul.f32 %v751, %v393
        %v767 = vmul.f32 %v751, %v394
        %v768 = vmul.f32 %v755, %v395
        %v769 = vmul.f32 %v755, %v396
        %v770 = vmul.f32 %v759, %v397
        %v771 = vmul.f32 %v759, %v398
        %v772 = vsel %vm417, %v764, 0.0
        %773 = vadd.xlane.f32.xlu0 %v772
        %v774 = vpop.xlane.xlu0 %773
        %v775 = vsel %vm417, %v765, 0.0
        %776 = vadd.xlane.f32.xlu0 %v775
        %v777 = vpop.xlane.xlu0 %776
        %v778 = vsel %vm417, %v766, 0.0
        %779 = vadd.xlane.f32.xlu0 %v778
        %v780 = vpop.xlane.xlu0 %779
        %v781 = vsel %vm417, %v767, 0.0
        %782 = vadd.xlane.f32.xlu0 %v781
        %v783 = vpop.xlane.xlu0 %782
        %v784 = vsel %vm417, %v768, 0.0
        %785 = vadd.xlane.f32.xlu0 %v784
        %v786 = vpop.xlane.xlu0 %785
        %v787 = vsel %vm417, %v769, 0.0
        %788 = vadd.xlane.f32.xlu0 %v787
        %v789 = vpop.xlane.xlu0 %788
        %v790 = vsel %vm417, %v770, 0.0
        %791 = vadd.xlane.f32.xlu0 %v790
        %v792 = vpop.xlane.xlu0 %791
        %v793 = vsel %vm417, %v771, 0.0
        %794 = vadd.xlane.f32.xlu0 %v793
        %v795 = vpop.xlane.xlu0 %794
        %v796 = vmul.f32 %v774, %v774
        %v797 = vmul.f32 %v777, %v777
        %v798 = vmul.f32 %v780, %v780
        %v799 = vmul.f32 %v783, %v783
        %v800 = vmul.f32 %v786, %v786
        %v801 = vmul.f32 %v789, %v789
        %v802 = vmul.f32 %v792, %v792
        %v803 = vmul.f32 %v795, %v795
        %v804 = vand.u32 2147483647, %v774
        %v805 = vand.u32 2147483647, %v777
        %v806 = vand.u32 2147483647, %v780
        %v807 = vand.u32 2147483647, %v783
        %v808 = vand.u32 2147483647, %v786
        %v809 = vand.u32 2147483647, %v789
        %v810 = vand.u32 2147483647, %v792
        %v811 = vand.u32 2147483647, %v795
        %v812 = vmul.f32 %v774, %v804
        %v813 = vmul.f32 %v777, %v805
        %v814 = vmul.f32 %v780, %v806
        %v815 = vmul.f32 %v783, %v807
        %v816 = vmul.f32 %v786, %v808
        %v817 = vmul.f32 %v789, %v809
        %v818 = vmul.f32 %v792, %v810
        %v819 = vmul.f32 %v795, %v811
        %v820 = vadd.f32 %v796, 1.0
        %v821 = vadd.f32 %v797, 1.0
        %v822 = vadd.f32 %v798, 1.0
        %v823 = vadd.f32 %v799, 1.0
        %v824 = vadd.f32 %v800, 1.0
        %v825 = vadd.f32 %v801, 1.0
        %v826 = vadd.f32 %v802, 1.0
        %v827 = vadd.f32 %v803, 1.0
        %v828 = vrcp.pop %v820
        %v829 = vrcp.pop %v821
        %v830 = vrcp.pop %v822
        %v831 = vrcp.pop %v823
        %v832 = vrcp.pop %v824
        %v833 = vrcp.pop %v825
        %v834 = vrcp.pop %v826
        %v835 = vrcp.pop %v827
        %v836 = vmul.f32 %v812, %v828
        %v837 = vmul.f32 %v813, %v829
        %v838 = vmul.f32 %v814, %v830
        %v839 = vmul.f32 %v815, %v831
        %v840 = vmul.f32 %v816, %v832
        %v841 = vmul.f32 %v817, %v833
        %v842 = vmul.f32 %v818, %v834
        %v843 = vmul.f32 %v819, %v835
        %v852 = vlaneseq
        %v853 = vshrl.u32 %v852, 7
        %v854 = vsub.s32 %v499, %v853
        %v855 = vrot.slane %v836, %v854
        %v856 = vlaneseq
        %v857 = vshrl.u32 %v856, 7
        %v858 = vsub.s32 %v504, %v857
        %v859 = vrot.slane %v837, %v858
        %v860 = vsel %vm509, %v859, %v855
        %v861 = vlaneseq
        %v862 = vshrl.u32 %v861, 7
        %v863 = vsub.s32 %v499, %v862
        %v864 = vrot.slane %v838, %v863
        %v865 = vlaneseq
        %v866 = vshrl.u32 %v865, 7
        %v867 = vsub.s32 %v504, %v866
        %v868 = vrot.slane %v839, %v867
        %v869 = vsel %vm509, %v868, %v864
        %v870 = vlaneseq
        %v871 = vshrl.u32 %v870, 7
        %v872 = vsub.s32 %v499, %v871
        %v873 = vrot.slane %v840, %v872
        %v874 = vlaneseq
        %v875 = vshrl.u32 %v874, 7
        %v876 = vsub.s32 %v504, %v875
        %v877 = vrot.slane %v841, %v876
        %v878 = vsel %vm509, %v877, %v873
        %v879 = vlaneseq
        %v880 = vshrl.u32 %v879, 7
        %v881 = vsub.s32 %v499, %v880
        %v882 = vrot.slane %v842, %v881
        %v883 = vlaneseq
        %v884 = vshrl.u32 %v883, 7
        %v885 = vsub.s32 %v504, %v884
        %v886 = vrot.slane %v843, %v885
        %v887 = vsel %vm509, %v886, %v882
        %v888 = vsel %vm538, %v869, %v860
        %v889 = vsel %vm540, %v878, %v888
        %v890 = vsel %vm542, %v887, %v889
        %892 = vst.msk [vmem:[%s173] sm:$0xf] %vm545, %v890
        %s893 = sand.u32 %s75, 1
        %s894 = scalar_lea.sflag [#allocation4], %s893
        %s895 = sand.u32 %s75, 1
        %s896 = smul.addr %s895, 4
        %s897 = scalar_lea.vmem [#allocation7], %s896
        // Predicated region
        $region37: #{tpu_custom_call.1} parent=27 // pred_check
          %p898 = pneg %p85
        $region38: #{tpu_custom_call.1} parent=27 // pred_check_branch
          %900 = sbr.rel (%p898) target = $region40
        $region39: #{tpu_custom_call.1} parent=27 // pred_region
          %s902 = ssub.s32 64, 64
          %903 = vsyncadd %s894, %s902
          %s904 = smul.addr %s20, 64
          %s905 = scalar_lea.hbm %s2, %s904
          %s907 = sshll.u32 %s897, 4
          %s908 = int_to_ptr.vmem [resolvable:$true] %s907
          %910 = dma.vmem_to_hbm [thread:$0]  %s908, 64, %s905, %s894
        $region40: #{tpu_custom_call.1} parent=27 // pred_fallthru
          _
      $region28: #{tpu_custom_call.1} parent=5 // pred_fallthru
        _
      %p911 = scmp.le.s32.totalorder 2, %s15
      // Predicated region
      $region41: #{tpu_custom_call.1} parent=5 // pred_check
        %p912 = pneg %p911
      $region42: #{tpu_custom_call.1} parent=5 // pred_check_branch
        %914 = sbr.rel (%p912) target = $region44
      $region43: #{tpu_custom_call.1} parent=5 // pred_region
        %s915 = ssub.s32 %s15, 2
        // Predicated region
        $region45: #{tpu_custom_call.1} parent=43 // pred_check
          %p916 = pneg %p91
        $region46: #{tpu_custom_call.1} parent=43 // pred_check_branch
          %918 = sbr.rel (%p916) target = $region48
        $region47: #{tpu_custom_call.1} parent=43 // pred_region
          %s919 = sand.u32 %s76, 1
          %s920 = scalar_lea.sflag [#allocation4], %s919
          %s921 = sand.u32 %s76, 1
          %s922 = smul.addr %s921, 4
          %s923 = scalar_lea.vmem [#allocation7], %s922
          %924 = dma.done %s920, 64
        $region48: #{tpu_custom_call.1} parent=43 // pred_fallthru
          _
      $region44: #{tpu_custom_call.1} parent=5 // pred_fallthru
        _
    $region6: #{tpu_custom_call.1} parent=1 // loop_footer
      %s19 = sadd.s32 1, %s15
    $region7: #{tpu_custom_call.1} parent=1 // loop_footer_branch
      %14 = sbr.rel target = $region3
    $region8: #{tpu_custom_call.1} parent=1 // loop_exit
      _
    %925 = vsyncpa [#allocation3], 1
    %s926 = scalar_lea.sflag [#allocation3], 1
    %927 = vsyncpa %s926, 1
    %928 = vsyncpa [#allocation6], 1
    %929 = vsyncpa [#allocation4], 1
    %s930 = scalar_lea.sflag [#allocation4], 1
    %931 = vsyncpa %s930, 1

</llo_original>
